<compile_context>
chip_gen: v6e
topology: v6e:2x2x1
jax: 0.10.0
libtpu: 0.0.40
codegen_flags: <defaults>
</compile_context>

<pallas_src>
import numpy as np
import jax
import jax.numpy as jnp
from jax.experimental import pallas as pl
from jax.experimental.pallas import tpu as pltpu

KH, KW = 3, 3          # conv kernel size
POOL = 2               # avg-pool kernel == stride
LANE = 128             # TPU lane width


def conv_block_kernel(xcol_ref, w_ref, b_ref, o_ref):
    # xcol_ref: (K, N*P2*Mpad)  bf16  im2col patches, one 128-padded slab per (image, pool offset)
    # w_ref   : (Cout, K)       bf16  conv weight, K ordered as (ki, kj, cin)
    # b_ref   : (Cout, 1)       f32   conv bias
    # o_ref   : (N, Cout, Mpad)       pooled, sigmoid-activated conv output (lane-dense)
    n_img, cout, mpad = o_ref.shape
    total = xcol_ref.shape[1]
    p2 = total // (n_img * mpad)          # POOL*POOL = 4

    # Single MXU matmul over all images and pool offsets, f32 accumulation.
    conv = jnp.dot(w_ref[...], xcol_ref[...],
                   preferred_element_type=jnp.float32)          # (Cout, N*P2*Mpad)
    conv = conv + b_ref[...]                                    # one lane broadcast of the bias

    # Sigmoid: clamp keeps exp finite so the approximate EUP reciprocal is safe.
    z = jnp.exp(-jnp.clip(conv, -30.0, 30.0))                   # EUP
    sig = pl.reciprocal(1.0 + z, approx=True)                   # EUP vrcp

    inv = 1.0 / p2
    for n in range(n_img):                # static unroll (N small)
        base = n * p2 * mpad
        acc = sig[:, base:base + mpad]
        for q in range(1, p2):            # 128-aligned static lane slices -> plain VPU adds
            acc = acc + sig[:, base + q * mpad: base + (q + 1) * mpad]
        o_ref[n] = (acc * inv).astype(o_ref.dtype)


def _im2col_pooled_nchw(x, kh, kw, pool, mpad):
    """(N, Cin, H, W) -> (K, N*pool*pool*mpad), K ordered (ki, kj, cin).

    Slab (n, di, dj) occupies lanes [(n*pool*pool + di*pool + dj) * mpad, ... + mpad);
    within a slab lanes are the pooled output positions (i, j) row-major, zero-padded
    from Hp*Wp up to mpad.
    """
    N, Cin, H, W = x.shape
    Ho, Wo = H - kh + 1, W - kw + 1
    Hp, Wp = Ho // pool, Wo // pool
    M = Hp * Wp
    K = kh * kw * Cin

    slabs = []
    for di in range(pool):
        for dj in range(pool):
            taps = []
            for ki in range(kh):
                for kj in range(kw):
                    a, b = di + ki, dj + kj
                    sl = x[:, :, a:a + pool * (Hp - 1) + 1:pool,
                              b:b + pool * (Wp - 1) + 1:pool]       # (N, Cin, Hp, Wp)
                    taps.append(sl.reshape(N, Cin, M))
            slabs.append(jnp.concatenate(taps, axis=1))             # (N, K, M)
    xcol = jnp.stack(slabs, axis=1)                                  # (N, P2, K, M)
    xcol = jnp.transpose(xcol, (2, 0, 1, 3))                         # (K, N, P2, M)  (tiny)
    xcol = jnp.pad(xcol, ((0, 0), (0, 0), (0, 0), (0, mpad - M)))    # lane-pad to 128
    return xcol.reshape(K, N * pool * pool * mpad)


def conv_block(x_nchw, weight_oihw, bias):
    """Pallas ConvBlock forward. x: (N, Cin, H, W) -> (N, Cout, Hp, Wp)."""
    N, Cin, H, W = x_nchw.shape
    Cout = weight_oihw.shape[0]
    Ho, Wo = H - KH + 1, W - KW + 1
    Hp, Wp = Ho // POOL, Wo // POOL
    K = KH * KW * Cin
    M = Hp * Wp
    P2 = POOL * POOL
    MPAD = ((M + LANE - 1) // LANE) * LANE

    # --- plain-JAX glue: bf16 cast first, then pool-offset im2col straight from NCHW ---
    x_bf16 = x_nchw.astype(jnp.bfloat16)
    xcol = _im2col_pooled_nchw(x_bf16, KH, KW, POOL, MPAD)           # (K, N*P2*MPAD) bf16
    w_t = jnp.transpose(weight_oihw, (0, 2, 3, 1)).reshape(Cout, K).astype(jnp.bfloat16)
    b_t = bias.reshape(Cout, 1).astype(jnp.float32)

    total = N * P2 * MPAD
    out = pl.pallas_call(
        conv_block_kernel,
        out_shape=jax.ShapeDtypeStruct((N, Cout, MPAD), x_nchw.dtype),
        grid=(1,),                                                    # single fused step
        in_specs=[
            pl.BlockSpec((K, total), lambda i: (0, 0)),
            pl.BlockSpec((Cout, K), lambda i: (0, 0)),
            pl.BlockSpec((Cout, 1), lambda i: (0, 0)),
        ],
        out_specs=pl.BlockSpec((N, Cout, MPAD), lambda i: (0, 0, 0)),
        compiler_params=pltpu.CompilerParams(dimension_semantics=("arbitrary",)),
    )(xcol, w_t, b_t)

    return out[:, :, :M].reshape(N, Cout, Hp, Wp)                     # already NCHW


def _reference(x_nchw, weight_oihw, bias):
    """Pure-JAX f32 reference mirroring the PyTorch module."""
    y = jax.lax.conv_general_dilated(
        x_nchw, weight_oihw, window_strides=(1, 1), padding="VALID",
        dimension_numbers=("NCHW", "OIHW", "NCHW"))
    y = y + bias[None, :, None, None]
    y = jax.nn.sigmoid(y)
    N, C, Ho, Wo = y.shape
    Hp, Wp = Ho // POOL, Wo // POOL
    y = y[:, :, :Hp * POOL, :Wp * POOL].reshape(N, C, Hp, POOL, Wp, POOL)
    return y.mean(axis=(3, 5))


if __name__ == "__main__":
    # Shapes consistent with the module: in_channels=4, out_channels=8,
    # kernel 3x3, stride 1, padding 0; input NCHW = (2, 4, 16, 16).
    N, Cin, Cout, H, W = 2, 4, 8, 16, 16

    key = jax.random.PRNGKey(0)
    kx, kw, kb = jax.random.split(key, 3)
    x = jax.random.normal(kx, (N, Cin, H, W), dtype=jnp.float32)

    # Deterministic PyTorch-style init: U(-k, k), k = 1/sqrt(fan_in).
    fan_in = Cin * KH * KW
    bound = 1.0 / np.sqrt(fan_in)
    weight = jax.random.uniform(kw, (Cout, Cin, KH, KW), jnp.float32, -bound, bound)
    bias = jax.random.uniform(kb, (Cout,), jnp.float32, -bound, bound)

    out = jax.jit(conv_block)(x, weight, bias)
    out = jax.block_until_ready(out)

    ref = _reference(x, weight, bias)
    # bf16 MXU operands + approximate EUP reciprocal -> compare against the f32
    # reference with a loose tolerance (results won't match an f32 PyTorch
    # baseline beyond ~1e-2 relative).
    np.testing.assert_allclose(np.asarray(out), np.asarray(ref), rtol=2e-2, atol=2e-2)

    print("KERNEL_OK")
</pallas_src>

<mosaic_0001>
module attributes {stable_mosaic.version = 11 : i64} {
  func.func @conv_block_kernel(%arg0: i32, %arg1: memref<36x1024xbf16, #tpu.memory_space<vmem>>, %arg2: memref<8x36xbf16, #tpu.memory_space<vmem>>, %arg3: memref<8x1xf32, #tpu.memory_space<vmem>>, %arg4: memref<2x8x128xf32, #tpu.memory_space<vmem>>) attributes {dimension_semantics = [#tpu.dimension_semantics<arbitrary>], iteration_bounds = array<i64: 1>, scalar_prefetch = 0 : i64, scratch_operands = 0 : i64, tpu.core_type = #tpu.core_type<tc>, window_params = [{pipeline_mode = #tpu.pipeline_mode<synchronous>, transform_indices = @transform_0, window_bounds = array<i64: 36, 1024>}, {pipeline_mode = #tpu.pipeline_mode<synchronous>, transform_indices = @transform_1, window_bounds = array<i64: 8, 36>}, {pipeline_mode = #tpu.pipeline_mode<synchronous>, transform_indices = @transform_2, window_bounds = array<i64: 8, 1>}, {pipeline_mode = #tpu.pipeline_mode<synchronous>, transform_indices = @transform_3, window_bounds = array<i64: 2, 8, 128>}]} {
    %c0 = arith.constant 0 : index
    %c0_0 = arith.constant 0 : index
    %0 = vector.load %arg2[%c0, %c0_0] : memref<8x36xbf16, #tpu.memory_space<vmem>>, vector<8x36xbf16>
    %c0_1 = arith.constant 0 : index
    %c0_2 = arith.constant 0 : index
    %1 = vector.load %arg1[%c0_1, %c0_2] : memref<36x1024xbf16, #tpu.memory_space<vmem>>, vector<36x1024xbf16>
    %cst = arith.constant dense<0.000000e+00> : vector<8x1024xf32>
    %2 = tpu.matmul %0, %1, %cst {dimension_numbers = #tpu.dot_dimension_numbers<[1], [0], [0], [1], [0, 0, 1, 1], [], []>} : vector<8x36xbf16>, vector<36x1024xbf16>, vector<8x1024xf32> -> vector<8x1024xf32>
    %c0_3 = arith.constant 0 : index
    %c0_4 = arith.constant 0 : index
    %3 = vector.load %arg3[%c0_3, %c0_4] : memref<8x1xf32, #tpu.memory_space<vmem>>, vector<8x1xf32>
    %4 = vector.broadcast %3 : vector<8x1xf32> to vector<8x1024xf32>
    %5 = arith.addf %2, %4 : vector<8x1024xf32>
    %cst_5 = arith.constant -3.000000e+01 : f32
    %cst_6 = arith.constant 3.000000e+01 : f32
    %6 = vector.broadcast %cst_5 : f32 to vector<8x1024xf32>
    %7 = arith.maximumf %6, %5 : vector<8x1024xf32>
    %8 = vector.broadcast %cst_6 : f32 to vector<8x1024xf32>
    %9 = arith.minimumf %8, %7 : vector<8x1024xf32>
    %cst_7 = arith.constant 0.000000e+00 : f32
    %10 = vector.broadcast %cst_7 : f32 to vector<8x1024xf32>
    %11 = arith.subf %10, %9 : vector<8x1024xf32>
    %12 = math.exp %11 : vector<8x1024xf32>
    %cst_8 = arith.constant 1.000000e+00 : f32
    %13 = vector.broadcast %cst_8 : f32 to vector<8x1024xf32>
    %14 = arith.addf %13, %12 : vector<8x1024xf32>
    %15 = tpu.reciprocal %14 {approx = true} : vector<8x1024xf32> -> vector<8x1024xf32>
    %16 = vector.extract_strided_slice %15 {offsets = [0, 0], sizes = [8, 128], strides = [1, 1]} : vector<8x1024xf32> to vector<8x128xf32>
    %17 = vector.extract_strided_slice %15 {offsets = [0, 128], sizes = [8, 128], strides = [1, 1]} : vector<8x1024xf32> to vector<8x128xf32>
    %18 = arith.addf %16, %17 : vector<8x128xf32>
    %19 = vector.extract_strided_slice %15 {offsets = [0, 256], sizes = [8, 128], strides = [1, 1]} : vector<8x1024xf32> to vector<8x128xf32>
    %20 = arith.addf %18, %19 : vector<8x128xf32>
    %21 = vector.extract_strided_slice %15 {offsets = [0, 384], sizes = [8, 128], strides = [1, 1]} : vector<8x1024xf32> to vector<8x128xf32>
    %22 = arith.addf %20, %21 : vector<8x128xf32>
    %cst_9 = arith.constant 2.500000e-01 : f32
    %23 = vector.broadcast %cst_9 : f32 to vector<8x128xf32>
    %24 = arith.mulf %22, %23 : vector<8x128xf32>
    %c0_10 = arith.constant 0 : index
    %c0_11 = arith.constant 0 : index
    %c0_12 = arith.constant 0 : index
    %25 = vector.load %arg4[%c0_10, %c0_11, %c0_12] : memref<2x8x128xf32, #tpu.memory_space<vmem>>, vector<1x8x128xf32>
    %26 = vector.shape_cast %25 : vector<1x8x128xf32> to vector<8x128xf32>
    %27 = vector.shape_cast %24 : vector<8x128xf32> to vector<1x8x128xf32>
    tpu.vector_store %arg4[%c0_10, %c0_11, %c0_12], %27 {strides = array<i32>} : memref<2x8x128xf32, #tpu.memory_space<vmem>>, vector<1x8x128xf32>,
    %28 = vector.extract_strided_slice %15 {offsets = [0, 512], sizes = [8, 128], strides = [1, 1]} : vector<8x1024xf32> to vector<8x128xf32>
    %29 = vector.extract_strided_slice %15 {offsets = [0, 640], sizes = [8, 128], strides = [1, 1]} : vector<8x1024xf32> to vector<8x128xf32>
    %30 = arith.addf %28, %29 : vector<8x128xf32>
    %31 = vector.extract_strided_slice %15 {offsets = [0, 768], sizes = [8, 128], strides = [1, 1]} : vector<8x1024xf32> to vector<8x128xf32>
    %32 = arith.addf %30, %31 : vector<8x128xf32>
    %33 = vector.extract_strided_slice %15 {offsets = [0, 896], sizes = [8, 128], strides = [1, 1]} : vector<8x1024xf32> to vector<8x128xf32>
    %34 = arith.addf %32, %33 : vector<8x128xf32>
    %cst_13 = arith.constant 2.500000e-01 : f32
    %35 = vector.broadcast %cst_13 : f32 to vector<8x128xf32>
    %36 = arith.mulf %34, %35 : vector<8x128xf32>
    %c1 = arith.constant 1 : index
    %c0_14 = arith.constant 0 : index
    %c0_15 = arith.constant 0 : index
    %37 = vector.load %arg4[%c1, %c0_14, %c0_15] : memref<2x8x128xf32, #tpu.memory_space<vmem>>, vector<1x8x128xf32>
    %38 = vector.shape_cast %37 : vector<1x8x128xf32> to vector<8x128xf32>
    %39 = vector.shape_cast %36 : vector<8x128xf32> to vector<1x8x128xf32>
    tpu.vector_store %arg4[%c1, %c0_14, %c0_15], %39 {strides = array<i32>} : memref<2x8x128xf32, #tpu.memory_space<vmem>>, vector<1x8x128xf32>,
    return
  }
  func.func @transform_0(%arg0: i32) -> (i32, i32) {
    %c0_i32 = arith.constant 0 : i32
    %c0_i32_0 = arith.constant 0 : i32
    %c0_i32_1 = arith.constant 0 : i32
    return %c0_i32, %c0_i32_0 : i32, i32
  }
  func.func @transform_1(%arg0: i32) -> (i32, i32) {
    %c0_i32 = arith.constant 0 : i32
    %c0_i32_0 = arith.constant 0 : i32
    %c0_i32_1 = arith.constant 0 : i32
    return %c0_i32, %c0_i32_0 : i32, i32
  }
  func.func @transform_2(%arg0: i32) -> (i32, i32) {
    %c0_i32 = arith.constant 0 : i32
    %c0_i32_0 = arith.constant 0 : i32
    %c0_i32_1 = arith.constant 0 : i32
    return %c0_i32, %c0_i32_0 : i32, i32
  }
  func.func @transform_3(%arg0: i32) -> (i32, i32, i32) {
    %c0_i32 = arith.constant 0 : i32
    %c0_i32_0 = arith.constant 0 : i32
    %c0_i32_1 = arith.constant 0 : i32
    %c0_i32_2 = arith.constant 0 : i32
    return %c0_i32, %c0_i32_0, %c0_i32_1 : i32, i32, i32
  }
}

</mosaic_0001>

<llo_original>
// kernel: conv_block.1
$region0: #{conv_block.1}
  #allocation0 [shape = 'u32[]', space=smem, size = 0x4, offset = 0x4, fixed_abs, tag = 'smem constant byte address 0x4 - core index']
  #allocation1 [shape = 'u32[144,128]{1,0:T(1,128)}', space=vmem, size = 0x12000, scoped, tag = 'internal scratch']
  %s0 = inlined_call_operand.vmem [shape: bf16[36,1024], index: 0, kind: input, shape index: {}]
  %s1 = inlined_call_operand.vmem [shape: bf16[8,36], index: 1, kind: input, shape index: {}]
  %s2 = inlined_call_operand.vmem [shape: f32[8,1], index: 2, kind: input, shape index: {}]
  %s3 = inlined_call_operand.vmem [shape: f32[2,8,128], index: 3, kind: output, shape index: {}]
  %s4 = sld [smem:[#allocation0]]
  $region22: #{conv_block.1} parent=0
    _
  %s6 = ssub.s32 1, %s4
  %s7 = scalar_select 0, %s6, %s4
  // Predicated region
  $region2: #{conv_block.1} parent=0 // pred_check
    _
  $region3: #{conv_block.1} parent=0 // pred_check_branch
    %9 = sbr.rel (0) target = $region5
  $region4: #{conv_block.1} parent=0 // pred_region
    _
  $region5: #{conv_block.1} parent=0 // pred_fallthru
    _
  // Predicated region
  $region6: #{conv_block.1} parent=0 // pred_check
    _
  $region7: #{conv_block.1} parent=0 // pred_check_branch
    %11 = sbr.rel (0) target = $region9
  $region8: #{conv_block.1} parent=0 // pred_region
    _
  $region9: #{conv_block.1} parent=0 // pred_fallthru
    _
  // Predicated region
  $region10: #{conv_block.1} parent=0 // pred_check
    _
  $region11: #{conv_block.1} parent=0 // pred_check_branch
    %13 = sbr.rel (0) target = $region13
  $region12: #{conv_block.1} parent=0 // pred_region
    _
  $region13: #{conv_block.1} parent=0 // pred_fallthru
    _
  %v15 = vld [vmem:[%s1] sm:$0xf]
  %v16 = vld [vmem:[%s0] sm:$0xff]
  %v17 = vld [vmem:[%s0 + $0x8] sm:$0xff]
  %v18 = vld [vmem:[%s0 + $0x10] sm:$0xff]
  %v19 = vld [vmem:[%s0 + $0x18] sm:$0xff]
  %v20 = vld [vmem:[%s0 + $0x20] sm:$0xff]
  %v21 = vld [vmem:[%s0 + $0x28] sm:$0xff]
  %v22 = vld [vmem:[%s0 + $0x30] sm:$0xff]
  %v23 = vld [vmem:[%s0 + $0x38] sm:$0xff]
  %v24 = vld [vmem:[%s0 + $0x40] sm:$0xff]
  %v25 = vld [vmem:[%s0 + $0x48] sm:$0xff]
  %v26 = vld [vmem:[%s0 + $0x50] sm:$0xff]
  %v27 = vld [vmem:[%s0 + $0x58] sm:$0xff]
  %v28 = vld [vmem:[%s0 + $0x60] sm:$0xff]
  %v29 = vld [vmem:[%s0 + $0x68] sm:$0xff]
  %v30 = vld [vmem:[%s0 + $0x70] sm:$0xff]
  %v31 = vld [vmem:[%s0 + $0x78] sm:$0xff]
  %v32 = vld [vmem:[%s0 + $0x80] sm:$0x33]
  %v33 = vld [vmem:[%s0 + $0x88] sm:$0x33]
  %v34 = vld [vmem:[%s0 + $0x90] sm:$0x33]
  %v35 = vld [vmem:[%s0 + $0x98] sm:$0x33]
  %v36 = vld [vmem:[%s2] sm:$0xff]
  %38 = vset.pattern.permute.xlu0 0
  %39 = vperm.xlu0 %38, %v36
  %v40 = vpop.permute.xlu0 %39
  %v62 = vunpack.c.l.b16 %v16
  %v63 = vunpack.c.h.b16 %v16
  %v64 = vunpack.c.l.b16 %v17
  %v65 = vunpack.c.h.b16 %v17
  %v66 = vunpack.c.l.b16 %v18
  %v67 = vunpack.c.h.b16 %v18
  %v68 = vunpack.c.l.b16 %v19
  %v69 = vunpack.c.h.b16 %v19
  %v70 = vunpack.c.l.b16 %v20
  %v71 = vunpack.c.h.b16 %v20
  %v72 = vunpack.c.l.b16 %v21
  %v73 = vunpack.c.h.b16 %v21
  %v74 = vunpack.c.l.b16 %v22
  %v75 = vunpack.c.h.b16 %v22
  %v76 = vunpack.c.l.b16 %v23
  %v77 = vunpack.c.h.b16 %v23
  %v78 = vunpack.c.l.b16 %v24
  %v79 = vunpack.c.h.b16 %v24
  %v80 = vunpack.c.l.b16 %v25
  %v81 = vunpack.c.h.b16 %v25
  %v82 = vunpack.c.l.b16 %v26
  %v83 = vunpack.c.h.b16 %v26
  %v84 = vunpack.c.l.b16 %v27
  %v85 = vunpack.c.h.b16 %v27
  %v86 = vunpack.c.l.b16 %v28
  %v87 = vunpack.c.h.b16 %v28
  %v88 = vunpack.c.l.b16 %v29
  %v89 = vunpack.c.h.b16 %v29
  %v90 = vunpack.c.l.b16 %v30
  %v91 = vunpack.c.h.b16 %v30
  %v92 = vunpack.c.l.b16 %v31
  %v93 = vunpack.c.h.b16 %v31
  %v94 = vunpack.c.l.b16 %v32
  %v95 = vunpack.c.h.b16 %v32
  %v96 = vunpack.c.l.b16 %v33
  %v97 = vunpack.c.h.b16 %v33
  %v98 = vunpack.c.l.b16 %v34
  %v99 = vunpack.c.h.b16 %v34
  %v100 = vunpack.c.l.b16 %v35
  %v101 = vunpack.c.h.b16 %v35
  %v102 = vpack.c.b16 %v70, %v62
  %v103 = vpack.c.b16 %v71, %v63
  %v104 = vpack.c.b16 %v72, %v64
  %v105 = vpack.c.b16 %v73, %v65
  %v106 = vpack.c.b16 %v74, %v66
  %v107 = vpack.c.b16 %v75, %v67
  %v108 = vpack.c.b16 %v76, %v68
  %v109 = vpack.c.b16 %v77, %v69
  %v110 = vpack.c.b16 %v86, %v78
  %v111 = vpack.c.b16 %v87, %v79
  %v112 = vpack.c.b16 %v88, %v80
  %v113 = vpack.c.b16 %v89, %v81
  %v114 = vpack.c.b16 %v90, %v82
  %v115 = vpack.c.b16 %v91, %v83
  %v116 = vpack.c.b16 %v92, %v84
  %v117 = vpack.c.b16 %v93, %v85
  %v118 = vpack.c.b16 %v94, %v94
  %v119 = vpack.c.b16 %v95, %v95
  %v120 = vpack.c.b16 %v96, %v96
  %v121 = vpack.c.b16 %v97, %v97
  %v122 = vpack.c.b16 %v98, %v98
  %v123 = vpack.c.b16 %v99, %v99
  %v124 = vpack.c.b16 %v100, %v100
  %v125 = vpack.c.b16 %v101, %v101
  %vm142 = vcmask 293888
  %v144 = vsel %vm142, %v15, 0
  %vm146 = vcmask 1041408
  %v148 = vsel %vm146, %v118, 0
  %v151 = vsel %vm146, %v119, 0
  %v154 = vsel %vm146, %v120, 0
  %v157 = vsel %vm146, %v121, 0
  %v160 = vsel %vm146, %v122, 0
  %v163 = vsel %vm146, %v123, 0
  %v166 = vsel %vm146, %v124, 0
  %v169 = vsel %vm146, %v125, 0
  %171 = vmatprep.subr.bf16.mxu0 0
  %172 = vmatpush1.bf16.msra.mxu0 0
  %173 = vmatprep.subr.bf16.mxu0 0
  %174 = vmatpush1.bf16.msra.mxu0 0
  %175 = vmatprep.subr.bf16.mxu0 0
  %176 = vmatpush1.bf16.msra.mxu0 0
  %177 = vmatprep.subr.bf16.mxu0 0
  %178 = vmatpush1.bf16.msra.mxu0 0
  %179 = vmatprep.subr.bf16.mxu0 0
  %180 = vmatpush1.bf16.msra.mxu0 0
  %181 = vmatprep.subr.bf16.mxu0 %v151
  %182 = vmatpush1.bf16.msra.mxu0 %v148
  %183 = vmatprep.subr.bf16.mxu0 %v111
  %184 = vmatpush1.bf16.msra.mxu0 %v110
  %185 = vmatprep.subr.bf16.mxu0 %v103
  %186 = vmatpush1.bf16.msra.mxu0 %v102
  %187 = vmatprep.subr.bf16.mxu0 0
  %188 = vmatpush2.bf16.msra.mxu0 0
  %189 = vmatprep.subr.bf16.mxu0 0
  %190 = vmatpush2.bf16.msra.mxu0 0
  %191 = vmatprep.subr.bf16.mxu0 0
  %192 = vmatpush2.bf16.msra.mxu0 0
  %193 = vmatprep.subr.bf16.mxu0 0
  %194 = vmatpush2.bf16.msra.mxu0 0
  %195 = vmatprep.subr.bf16.mxu0 0
  %196 = vmatpush2.bf16.msra.mxu0 0
  %197 = vmatprep.subr.bf16.mxu0 0
  %198 = vmatpush2.bf16.msra.mxu0 0
  %199 = vmatprep.subr.bf16.mxu0 0
  %200 = vmatpush2.bf16.msra.mxu0 0
  %201 = vmatprep.subr.bf16.mxu0 0
  %202 = vmatpush2.bf16.msra.mxu0 0
  %203 = vmatprep.mubr.bf16.mxu0 0
  %204 = vmatmul.mubr.bf16.gmra.mxu0 %v144
  %v205 = vpop.f32.mrf.mxu0
  %v206 = vadd.f32 %v40, %v205
  %v207 = vpop.f32.mrf.mxu0
  %v208 = vadd.f32 %v40, %v207
  %v209 = vpop.f32.mrf.mxu0
  %v210 = vpop.f32.mrf.mxu0
  %211 = vdwg.mxu0
  %212 = vmatprep.subr.bf16.mxu0 0
  %213 = vmatpush1.bf16.msra.mxu0 0
  %214 = vmatprep.subr.bf16.mxu0 0
  %215 = vmatpush1.bf16.msra.mxu0 0
  %216 = vmatprep.subr.bf16.mxu0 0
  %217 = vmatpush1.bf16.msra.mxu0 0
  %218 = vmatprep.subr.bf16.mxu0 0
  %219 = vmatpush1.bf16.msra.mxu0 0
  %220 = vmatprep.subr.bf16.mxu0 0
  %221 = vmatpush1.bf16.msra.mxu0 0
  %222 = vmatprep.subr.bf16.mxu0 %v157
  %223 = vmatpush1.bf16.msra.mxu0 %v154
  %224 = vmatprep.subr.bf16.mxu0 %v113
  %225 = vmatpush1.bf16.msra.mxu0 %v112
  %226 = vmatprep.subr.bf16.mxu0 %v105
  %227 = vmatpush1.bf16.msra.mxu0 %v104
  %228 = vmatprep.subr.bf16.mxu0 0
  %229 = vmatpush2.bf16.msra.mxu0 0
  %230 = vmatprep.subr.bf16.mxu0 0
  %231 = vmatpush2.bf16.msra.mxu0 0
  %232 = vmatprep.subr.bf16.mxu0 0
  %233 = vmatpush2.bf16.msra.mxu0 0
  %234 = vmatprep.subr.bf16.mxu0 0
  %235 = vmatpush2.bf16.msra.mxu0 0
  %236 = vmatprep.subr.bf16.mxu0 0
  %237 = vmatpush2.bf16.msra.mxu0 0
  %238 = vmatprep.subr.bf16.mxu0 0
  %239 = vmatpush2.bf16.msra.mxu0 0
  %240 = vmatprep.subr.bf16.mxu0 0
  %241 = vmatpush2.bf16.msra.mxu0 0
  %242 = vmatprep.subr.bf16.mxu0 0
  %243 = vmatpush2.bf16.msra.mxu0 0
  %244 = vmatprep.mubr.bf16.mxu0 0
  %245 = vmatmul.mubr.bf16.gmra.mxu0 %v144
  %v246 = vpop.f32.mrf.mxu0
  %v247 = vadd.f32 %v40, %v246
  %v248 = vpop.f32.mrf.mxu0
  %v249 = vadd.f32 %v40, %v248
  %v250 = vpop.f32.mrf.mxu0
  %v251 = vpop.f32.mrf.mxu0
  %252 = vdwg.mxu0
  %253 = vmatprep.subr.bf16.mxu0 0
  %254 = vmatpush1.bf16.msra.mxu0 0
  %255 = vmatprep.subr.bf16.mxu0 0
  %256 = vmatpush1.bf16.msra.mxu0 0
  %257 = vmatprep.subr.bf16.mxu0 0
  %258 = vmatpush1.bf16.msra.mxu0 0
  %259 = vmatprep.subr.bf16.mxu0 0
  %260 = vmatpush1.bf16.msra.mxu0 0
  %261 = vmatprep.subr.bf16.mxu0 0
  %262 = vmatpush1.bf16.msra.mxu0 0
  %263 = vmatprep.subr.bf16.mxu0 %v163
  %264 = vmatpush1.bf16.msra.mxu0 %v160
  %265 = vmatprep.subr.bf16.mxu0 %v115
  %266 = vmatpush1.bf16.msra.mxu0 %v114
  %267 = vmatprep.subr.bf16.mxu0 %v107
  %268 = vmatpush1.bf16.msra.mxu0 %v106
  %269 = vmatprep.subr.bf16.mxu0 0
  %270 = vmatpush2.bf16.msra.mxu0 0
  %271 = vmatprep.subr.bf16.mxu0 0
  %272 = vmatpush2.bf16.msra.mxu0 0
  %273 = vmatprep.subr.bf16.mxu0 0
  %274 = vmatpush2.bf16.msra.mxu0 0
  %275 = vmatprep.subr.bf16.mxu0 0
  %276 = vmatpush2.bf16.msra.mxu0 0
  %277 = vmatprep.subr.bf16.mxu0 0
  %278 = vmatpush2.bf16.msra.mxu0 0
  %279 = vmatprep.subr.bf16.mxu0 0
  %280 = vmatpush2.bf16.msra.mxu0 0
  %281 = vmatprep.subr.bf16.mxu0 0
  %282 = vmatpush2.bf16.msra.mxu0 0
  %283 = vmatprep.subr.bf16.mxu0 0
  %284 = vmatpush2.bf16.msra.mxu0 0
  %285 = vmatprep.mubr.bf16.mxu0 0
  %286 = vmatmul.mubr.bf16.gmra.mxu0 %v144
  %v287 = vpop.f32.mrf.mxu0
  %v288 = vadd.f32 %v40, %v287
  %v289 = vpop.f32.mrf.mxu0
  %v290 = vadd.f32 %v40, %v289
  %v291 = vpop.f32.mrf.mxu0
  %v292 = vpop.f32.mrf.mxu0
  %293 = vdwg.mxu0
  %294 = vmatprep.subr.bf16.mxu0 0
  %295 = vmatpush1.bf16.msra.mxu0 0
  %296 = vmatprep.subr.bf16.mxu0 0
  %297 = vmatpush1.bf16.msra.mxu0 0
  %298 = vmatprep.subr.bf16.mxu0 0
  %299 = vmatpush1.bf16.msra.mxu0 0
  %300 = vmatprep.subr.bf16.mxu0 0
  %301 = vmatpush1.bf16.msra.mxu0 0
  %302 = vmatprep.subr.bf16.mxu0 0
  %303 = vmatpush1.bf16.msra.mxu0 0
  %304 = vmatprep.subr.bf16.mxu0 %v169
  %305 = vmatpush1.bf16.msra.mxu0 %v166
  %306 = vmatprep.subr.bf16.mxu0 %v117
  %307 = vmatpush1.bf16.msra.mxu0 %v116
  %308 = vmatprep.subr.bf16.mxu0 %v109
  %309 = vmatpush1.bf16.msra.mxu0 %v108
  %310 = vmatprep.subr.bf16.mxu0 0
  %311 = vmatpush2.bf16.msra.mxu0 0
  %312 = vmatprep.subr.bf16.mxu0 0
  %313 = vmatpush2.bf16.msra.mxu0 0
  %314 = vmatprep.subr.bf16.mxu0 0
  %315 = vmatpush2.bf16.msra.mxu0 0
  %316 = vmatprep.subr.bf16.mxu0 0
  %317 = vmatpush2.bf16.msra.mxu0 0
  %318 = vmatprep.subr.bf16.mxu0 0
  %319 = vmatpush2.bf16.msra.mxu0 0
  %320 = vmatprep.subr.bf16.mxu0 0
  %321 = vmatpush2.bf16.msra.mxu0 0
  %322 = vmatprep.subr.bf16.mxu0 0
  %323 = vmatpush2.bf16.msra.mxu0 0
  %324 = vmatprep.subr.bf16.mxu0 0
  %325 = vmatpush2.bf16.msra.mxu0 0
  %326 = vmatprep.mubr.bf16.mxu0 0
  %327 = vmatmul.mubr.bf16.gmra.mxu0 %v144
  %v328 = vpop.f32.mrf.mxu0
  %v329 = vadd.f32 %v40, %v328
  %v330 = vpop.f32.mrf.mxu0
  %v331 = vadd.f32 %v40, %v330
  %v332 = vpop.f32.mrf.mxu0
  %v333 = vpop.f32.mrf.mxu0
  %334 = vdwg.mxu0
  %v335 = vmax.f32 %v206, -30.0
  %v336 = vmax.f32 %v208, -30.0
  %v337 = vmax.f32 %v247, -30.0
  %v338 = vmax.f32 %v249, -30.0
  %v339 = vmax.f32 %v288, -30.0
  %v340 = vmax.f32 %v290, -30.0
  %v341 = vmax.f32 %v329, -30.0
  %v342 = vmax.f32 %v331, -30.0
  %v343 = vmin.f32 %v335, 30.0
  %v344 = vmin.f32 %v336, 30.0
  %v345 = vmin.f32 %v337, 30.0
  %v346 = vmin.f32 %v338, 30.0
  %v347 = vmin.f32 %v339, 30.0
  %v348 = vmin.f32 %v340, 30.0
  %v349 = vmin.f32 %v341, 30.0
  %v350 = vmin.f32 %v342, 30.0
  %v351 = vsub.f32 0.0, %v343
  %v352 = vsub.f32 0.0, %v344
  %v353 = vsub.f32 0.0, %v345
  %v354 = vsub.f32 0.0, %v346
  %v355 = vsub.f32 0.0, %v347
  %v356 = vsub.f32 0.0, %v348
  %v357 = vsub.f32 0.0, %v349
  %v358 = vsub.f32 0.0, %v350
  %v359 = vmul.f32 %v351, 1.442695
  %v360 = vpow.pop %v359
  %v361 = vmul.f32 %v352, 1.442695
  %v362 = vpow.pop %v361
  %v363 = vmul.f32 %v353, 1.442695
  %v364 = vpow.pop %v363
  %v365 = vmul.f32 %v354, 1.442695
  %v366 = vpow.pop %v365
  %v367 = vmul.f32 %v355, 1.442695
  %v368 = vpow.pop %v367
  %v369 = vmul.f32 %v356, 1.442695
  %v370 = vpow.pop %v369
  %v371 = vmul.f32 %v357, 1.442695
  %v372 = vpow.pop %v371
  %v373 = vmul.f32 %v358, 1.442695
  %v374 = vpow.pop %v373
  %v375 = vadd.f32 %v360, 1.0
  %v376 = vadd.f32 %v362, 1.0
  %v377 = vadd.f32 %v364, 1.0
  %v378 = vadd.f32 %v366, 1.0
  %v379 = vadd.f32 %v368, 1.0
  %v380 = vadd.f32 %v370, 1.0
  %v381 = vadd.f32 %v372, 1.0
  %v382 = vadd.f32 %v374, 1.0
  %v383 = vrcp.pop %v375
  %v384 = vrcp.pop %v376
  %v385 = vrcp.pop %v377
  %v386 = vrcp.pop %v378
  %v387 = vrcp.pop %v379
  %v388 = vrcp.pop %v380
  %v389 = vrcp.pop %v381
  %v390 = vrcp.pop %v382
  %v391 = vadd.f32 %v383, %v384
  %v392 = vadd.f32 %v391, %v385
  %v393 = vadd.f32 %v392, %v386
  %v394 = vmul.f32 %v393, 0.25
  %395 = vst [vmem:[%s3] sm:$0xff] %v394
  %v396 = vadd.f32 %v387, %v388
  %v397 = vadd.f32 %v396, %v389
  %v398 = vadd.f32 %v397, %v390
  %v399 = vmul.f32 %v398, 0.25
  %s400 = scalar_lea.vmem %s3, 8
  %401 = vst [vmem:[%s400] sm:$0xff] %v399
  // Predicated region
  $region14: #{conv_block.1} parent=0 // pred_check
    _
  $region15: #{conv_block.1} parent=0 // pred_check_branch
    %403 = sbr.rel (0) target = $region17
  $region16: #{conv_block.1} parent=0 // pred_region
    _
  $region17: #{conv_block.1} parent=0 // pred_fallthru
    _
  // Predicated region
  $region18: #{conv_block.1} parent=0 // pred_check
    _
  $region19: #{conv_block.1} parent=0 // pred_check_branch
    %405 = sbr.rel (0) target = $region21
  $region20: #{conv_block.1} parent=0 // pred_region
    _
  $region21: #{conv_block.1} parent=0 // pred_fallthru
    _

</llo_original>
